<compile_context>
chip_gen: v7x
topology: tpu7x:2x2x1
jax: 0.10.0
libtpu: 0.0.40
codegen_flags: <defaults>
</compile_context>

<pallas_src>
import functools

import jax
import jax.numpy as jnp
from jax.experimental import pallas as pl
from jax.experimental.pallas import tpu as pltpu


VOCAB = 100
VOCAB_PAD = 128          # pad vocab to a 128-lane tile for the one-hot matmul
EMBED = 32
HIDDEN = 32
KERNEL_SIZE = 3


# ----------------------------------------------------------------------------
# Fused kernel: whole StudentModel forward for one batch element
# ----------------------------------------------------------------------------
def _student_kernel(tok_ref, emb_ref, convw_ref, convb_ref, fcw_ref, fcb_ref,
                    o_ref, *, seq_len, ksize, vocab_pad):
    out_len = seq_len - ksize + 1

    # ---- embedding lookup: one-hot(tokens) @ table, on the MXU --------------
    tok = tok_ref[0]                                             # (S, 1) int32
    vocab_iota = jax.lax.broadcasted_iota(jnp.int32, (seq_len, vocab_pad), 1)
    onehot = (vocab_iota == tok).astype(jnp.float32)             # (S, Vpad)
    emb = jnp.dot(onehot, emb_ref[...],
                  preferred_element_type=jnp.float32)            # (S, E)

    # ---- Conv1d (valid, stride 1) as K shifted matmuls -----------------------
    # conv[t, h] = b[h] + sum_dk emb[t+dk, :] @ w[dk, :, h]
    acc = jnp.zeros((out_len, convb_ref.shape[1]), jnp.float32)
    for dk in range(ksize):                                      # static unroll
        acc = acc + jnp.dot(emb[dk:dk + out_len, :], convw_ref[dk],
                            preferred_element_type=jnp.float32)
    conv = jnp.maximum(acc + convb_ref[...], 0.0)                # ReLU, (L, H)

    # ---- GlobalMaxPooling1D over the time axis -------------------------------
    pooled = jnp.max(conv, axis=0, keepdims=True)                # (1, H)

    # ---- fc: Linear(hidden, 1) ------------------------------------------------
    fc_out = jnp.sum(pooled * fcw_ref[...], axis=-1, keepdims=True) + fcb_ref[...]
    o_ref[0] = fc_out                                            # (1, 1)


# ----------------------------------------------------------------------------
# Wrapper
# ----------------------------------------------------------------------------
def student_forward(params, tokens, attention_mask=None):
    del attention_mask  # unused by StudentModel.forward (matches reference)
    B, S = tokens.shape
    assert S >= KERNEL_SIZE

    kern = functools.partial(_student_kernel, seq_len=S, ksize=KERNEL_SIZE,
                             vocab_pad=VOCAB_PAD)
    out = pl.pallas_call(
        kern,
        out_shape=jax.ShapeDtypeStruct((B, 1, 1), jnp.float32),
        grid=(B,),
        in_specs=[
            pl.BlockSpec((1, S, 1), lambda b: (b, 0, 0)),                     # tokens
            pl.BlockSpec((VOCAB_PAD, EMBED), lambda b: (0, 0)),               # emb table
            pl.BlockSpec((KERNEL_SIZE, EMBED, HIDDEN), lambda b: (0, 0, 0)),  # conv W
            pl.BlockSpec((1, HIDDEN), lambda b: (0, 0)),                      # conv b
            pl.BlockSpec((1, HIDDEN), lambda b: (0, 0)),                      # fc W (1,H)
            pl.BlockSpec((1, 1), lambda b: (0, 0)),                           # fc b
        ],
        out_specs=pl.BlockSpec((1, 1, 1), lambda b: (b, 0, 0)),
        compiler_params=pltpu.CompilerParams(
            dimension_semantics=("parallel",)),
    )(tokens[..., None].astype(jnp.int32),
      params["word_emb_pad"], params["conv_w"], params["conv_b"],
      params["fc_w"], params["fc_b"])
    return out.reshape(B, 1)


# ----------------------------------------------------------------------------
# Deterministic synthetic parameters (no checkpoint load)
# ----------------------------------------------------------------------------
def init_params(key):
    k = jax.random.split(key, 5)
    word = 0.02 * jax.random.normal(k[0], (VOCAB, EMBED), dtype=jnp.float32)
    word_pad = jnp.zeros((VOCAB_PAD, EMBED), jnp.float32).at[:VOCAB].set(word)
    return {
        "word_emb_pad": word_pad,                                             # (Vpad, E)
        "conv_w": 0.02 * jax.random.normal(k[1], (KERNEL_SIZE, EMBED, HIDDEN),
                                           dtype=jnp.float32),                # (K, E, H)
        "conv_b": 0.01 * jax.random.normal(k[2], (1, HIDDEN), dtype=jnp.float32),
        "fc_w": 0.02 * jax.random.normal(k[3], (1, HIDDEN), dtype=jnp.float32),  # (1, H)
        "fc_b": 0.01 * jax.random.normal(k[4], (1, 1), dtype=jnp.float32),
    }


# ----------------------------------------------------------------------------
# Pure-JAX reference for self-check
# ----------------------------------------------------------------------------
def reference_forward(params, tokens):
    B, S = tokens.shape
    L = S - KERNEL_SIZE + 1
    emb = jnp.take(params["word_emb_pad"], tokens, axis=0)                    # (B, S, E)
    conv = jnp.zeros((B, L, HIDDEN), jnp.float32)
    for dk in range(KERNEL_SIZE):
        conv = conv + jnp.einsum("ble,eh->blh", emb[:, dk:dk + L, :],
                                 params["conv_w"][dk])
    conv = jnp.maximum(conv + params["conv_b"], 0.0)                          # ReLU
    pooled = jnp.max(conv, axis=1)                                            # (B, H)
    return pooled @ params["fc_w"].T + params["fc_b"]                         # (B, 1)


# ----------------------------------------------------------------------------
if __name__ == "__main__":
    key = jax.random.PRNGKey(0)
    pkey, tkey = jax.random.split(key)
    params = init_params(pkey)

    B, S = 2, 16
    tokens = jax.random.randint(tkey, (B, S), 0, VOCAB, dtype=jnp.int32)
    attention_mask = jnp.ones((B, S), dtype=jnp.int32)   # ignored, as in PyTorch

    out = student_forward(params, tokens, attention_mask)
    jax.block_until_ready(out)

    assert out.shape == (B, 1) and out.dtype == jnp.float32
    ref = reference_forward(params, tokens)
    assert jnp.allclose(out, ref, atol=1e-5, rtol=1e-3), (out, ref)
    print("KERNEL_OK")
</pallas_src>

<mosaic_0001>
module attributes {stable_mosaic.version = 11 : i64} {
  func.func @_student_kernel(%arg0: i32, %arg1: memref<1x16x1xi32, #tpu.memory_space<vmem>>, %arg2: memref<128x32xf32, #tpu.memory_space<vmem>>, %arg3: memref<3x32x32xf32, #tpu.memory_space<vmem>>, %arg4: memref<1x32xf32, #tpu.memory_space<vmem>>, %arg5: memref<1x32xf32, #tpu.memory_space<vmem>>, %arg6: memref<1x1xf32, #tpu.memory_space<vmem>>, %arg7: memref<1x1x1xf32, #tpu.memory_space<vmem>>) attributes {dimension_semantics = [#tpu.dimension_semantics<parallel>], iteration_bounds = array<i64: 2>, scalar_prefetch = 0 : i64, scratch_operands = 0 : i64, tpu.core_type = #tpu.core_type<tc>, window_params = [{transform_indices = @transform_0, window_bounds = array<i64: 1, 16, 1>}, {pipeline_mode = #tpu.pipeline_mode<synchronous>, transform_indices = @transform_1, window_bounds = array<i64: 128, 32>}, {pipeline_mode = #tpu.pipeline_mode<synchronous>, transform_indices = @transform_2, window_bounds = array<i64: 3, 32, 32>}, {pipeline_mode = #tpu.pipeline_mode<synchronous>, transform_indices = @transform_3, window_bounds = array<i64: 1, 32>}, {pipeline_mode = #tpu.pipeline_mode<synchronous>, transform_indices = @transform_4, window_bounds = array<i64: 1, 32>}, {pipeline_mode = #tpu.pipeline_mode<synchronous>, transform_indices = @transform_5, window_bounds = array<i64: 1, 1>}, {transform_indices = @transform_6, window_bounds = array<i64: 1, 1, 1>}]} {
    %c0 = arith.constant 0 : index
    %c0_0 = arith.constant 0 : index
    %c0_1 = arith.constant 0 : index
    %0 = vector.load %arg1[%c0, %c0_0, %c0_1] : memref<1x16x1xi32, #tpu.memory_space<vmem>>, vector<1x16x1xi32>
    %1 = vector.shape_cast %0 : vector<1x16x1xi32> to vector<16x1xi32>
    %2 = tpu.iota {dimensions = array<i32: 1>} : vector<16x128xi32>
    %3 = vector.broadcast %1 : vector<16x1xi32> to vector<16x128xi32>
    %4 = arith.cmpi eq, %2, %3 : vector<16x128xi32>
    %5 = arith.extui %4 : vector<16x128xi1> to vector<16x128xi32>
    %6 = arith.sitofp %5 : vector<16x128xi32> to vector<16x128xf32>
    %c0_2 = arith.constant 0 : index
    %c0_3 = arith.constant 0 : index
    %7 = vector.load %arg2[%c0_2, %c0_3] : memref<128x32xf32, #tpu.memory_space<vmem>>, vector<128x32xf32>
    %cst = arith.constant dense<0.000000e+00> : vector<16x32xf32>
    %8 = tpu.matmul %6, %7, %cst {dimension_numbers = #tpu.dot_dimension_numbers<[1], [0], [0], [1], [0, 0, 1, 1], [], []>} : vector<16x128xf32>, vector<128x32xf32>, vector<16x32xf32> -> vector<16x32xf32>
    %cst_4 = arith.constant 0.000000e+00 : f32
    %9 = vector.broadcast %cst_4 : f32 to vector<14x32xf32>
    %10 = vector.extract_strided_slice %8 {offsets = [0, 0], sizes = [14, 32], strides = [1, 1]} : vector<16x32xf32> to vector<14x32xf32>
    %c0_5 = arith.constant 0 : index
    %c0_6 = arith.constant 0 : index
    %c0_7 = arith.constant 0 : index
    %11 = vector.load %arg3[%c0_5, %c0_6, %c0_7] : memref<3x32x32xf32, #tpu.memory_space<vmem>>, vector<1x32x32xf32>
    %12 = vector.shape_cast %11 : vector<1x32x32xf32> to vector<32x32xf32>
    %cst_8 = arith.constant dense<0.000000e+00> : vector<14x32xf32>
    %13 = tpu.matmul %10, %12, %cst_8 {dimension_numbers = #tpu.dot_dimension_numbers<[1], [0], [0], [1], [0, 0, 1, 1], [], []>} : vector<14x32xf32>, vector<32x32xf32>, vector<14x32xf32> -> vector<14x32xf32>
    %14 = arith.addf %9, %13 : vector<14x32xf32>
    %15 = vector.extract_strided_slice %8 {offsets = [1, 0], sizes = [14, 32], strides = [1, 1]} : vector<16x32xf32> to vector<14x32xf32>
    %c1 = arith.constant 1 : index
    %c0_9 = arith.constant 0 : index
    %c0_10 = arith.constant 0 : index
    %16 = vector.load %arg3[%c1, %c0_9, %c0_10] : memref<3x32x32xf32, #tpu.memory_space<vmem>>, vector<1x32x32xf32>
    %17 = vector.shape_cast %16 : vector<1x32x32xf32> to vector<32x32xf32>
    %cst_11 = arith.constant dense<0.000000e+00> : vector<14x32xf32>
    %18 = tpu.matmul %15, %17, %cst_11 {dimension_numbers = #tpu.dot_dimension_numbers<[1], [0], [0], [1], [0, 0, 1, 1], [], []>} : vector<14x32xf32>, vector<32x32xf32>, vector<14x32xf32> -> vector<14x32xf32>
    %19 = arith.addf %14, %18 : vector<14x32xf32>
    %20 = vector.extract_strided_slice %8 {offsets = [2, 0], sizes = [14, 32], strides = [1, 1]} : vector<16x32xf32> to vector<14x32xf32>
    %c2 = arith.constant 2 : index
    %c0_12 = arith.constant 0 : index
    %c0_13 = arith.constant 0 : index
    %21 = vector.load %arg3[%c2, %c0_12, %c0_13] : memref<3x32x32xf32, #tpu.memory_space<vmem>>, vector<1x32x32xf32>
    %22 = vector.shape_cast %21 : vector<1x32x32xf32> to vector<32x32xf32>
    %cst_14 = arith.constant dense<0.000000e+00> : vector<14x32xf32>
    %23 = tpu.matmul %20, %22, %cst_14 {dimension_numbers = #tpu.dot_dimension_numbers<[1], [0], [0], [1], [0, 0, 1, 1], [], []>} : vector<14x32xf32>, vector<32x32xf32>, vector<14x32xf32> -> vector<14x32xf32>
    %24 = arith.addf %19, %23 : vector<14x32xf32>
    %c0_15 = arith.constant 0 : index
    %c0_16 = arith.constant 0 : index
    %25 = vector.load %arg4[%c0_15, %c0_16] : memref<1x32xf32, #tpu.memory_space<vmem>>, vector<1x32xf32>
    %26 = vector.broadcast %25 : vector<1x32xf32> to vector<14x32xf32>
    %27 = arith.addf %24, %26 : vector<14x32xf32>
    %cst_17 = arith.constant 0.000000e+00 : f32
    %28 = vector.broadcast %cst_17 : f32 to vector<14x32xf32>
    %29 = arith.maximumf %27, %28 : vector<14x32xf32>
    %cst_18 = arith.constant dense<0xFF800000> : vector<32xf32>
    %30 = vector.multi_reduction <maximumf>, %29, %cst_18 [0] : vector<14x32xf32> to vector<32xf32>
    %31 = vector.shape_cast %30 : vector<32xf32> to vector<1x32xf32>
    %c0_19 = arith.constant 0 : index
    %c0_20 = arith.constant 0 : index
    %32 = vector.load %arg5[%c0_19, %c0_20] : memref<1x32xf32, #tpu.memory_space<vmem>>, vector<1x32xf32>
    %33 = arith.mulf %31, %32 : vector<1x32xf32>
    %cst_21 = arith.constant dense<0.000000e+00> : vector<1xf32>
    %34 = vector.multi_reduction <add>, %33, %cst_21 [1] : vector<1x32xf32> to vector<1xf32>
    %35 = vector.shape_cast %34 : vector<1xf32> to vector<1x1xf32>
    %c0_22 = arith.constant 0 : index
    %c0_23 = arith.constant 0 : index
    %36 = vector.load %arg6[%c0_22, %c0_23] : memref<1x1xf32, #tpu.memory_space<vmem>>, vector<1x1xf32>
    %37 = arith.addf %35, %36 : vector<1x1xf32>
    %c0_24 = arith.constant 0 : index
    %c0_25 = arith.constant 0 : index
    %c0_26 = arith.constant 0 : index
    %38 = vector.load %arg7[%c0_24, %c0_25, %c0_26] : memref<1x1x1xf32, #tpu.memory_space<vmem>>, vector<1x1x1xf32>
    %39 = vector.shape_cast %38 : vector<1x1x1xf32> to vector<1x1xf32>
    %40 = vector.shape_cast %37 : vector<1x1xf32> to vector<1x1x1xf32>
    tpu.vector_store %arg7[%c0_24, %c0_25, %c0_26], %40 {strides = array<i32>} : memref<1x1x1xf32, #tpu.memory_space<vmem>>, vector<1x1x1xf32>,
    return
  }
  func.func @transform_0(%arg0: i32) -> (i32, i32, i32) {
    %c0_i32 = arith.constant 0 : i32
    %c0_i32_0 = arith.constant 0 : i32
    %c0_i32_1 = arith.constant 0 : i32
    return %arg0, %c0_i32, %c0_i32_0 : i32, i32, i32
  }
  func.func @transform_1(%arg0: i32) -> (i32, i32) {
    %c0_i32 = arith.constant 0 : i32
    %c0_i32_0 = arith.constant 0 : i32
    %c0_i32_1 = arith.constant 0 : i32
    return %c0_i32, %c0_i32_0 : i32, i32
  }
  func.func @transform_2(%arg0: i32) -> (i32, i32, i32) {
    %c0_i32 = arith.constant 0 : i32
    %c0_i32_0 = arith.constant 0 : i32
    %c0_i32_1 = arith.constant 0 : i32
    %c0_i32_2 = arith.constant 0 : i32
    return %c0_i32, %c0_i32_0, %c0_i32_1 : i32, i32, i32
  }
  func.func @transform_3(%arg0: i32) -> (i32, i32) {
    %c0_i32 = arith.constant 0 : i32
    %c0_i32_0 = arith.constant 0 : i32
    %c0_i32_1 = arith.constant 0 : i32
    return %c0_i32, %c0_i32_0 : i32, i32
  }
  func.func @transform_4(%arg0: i32) -> (i32, i32) {
    %c0_i32 = arith.constant 0 : i32
    %c0_i32_0 = arith.constant 0 : i32
    %c0_i32_1 = arith.constant 0 : i32
    return %c0_i32, %c0_i32_0 : i32, i32
  }
  func.func @transform_5(%arg0: i32) -> (i32, i32) {
    %c0_i32 = arith.constant 0 : i32
    %c0_i32_0 = arith.constant 0 : i32
    %c0_i32_1 = arith.constant 0 : i32
    return %c0_i32, %c0_i32_0 : i32, i32
  }
  func.func @transform_6(%arg0: i32) -> (i32, i32, i32) {
    %c0_i32 = arith.constant 0 : i32
    %c0_i32_0 = arith.constant 0 : i32
    %c0_i32_1 = arith.constant 0 : i32
    return %arg0, %c0_i32, %c0_i32_0 : i32, i32, i32
  }
}

</mosaic_0001>

<llo_original>
// kernel: tpu_custom_call.1
$region0: #{tpu_custom_call.1}
  #allocation0 [shape = 'u32[]', space=smem, size = 0x4, offset = 0x4, fixed_abs, tag = 'smem constant byte address 0x4 - core index']
  #allocation1 [shape = 'u32[144,128]{1,0:T(1,128)}', space=vmem, size = 0x12000, scoped, tag = 'internal scratch']
  #allocation2 [shape = 'f32[1,1]{1,0:T(1,128)S(1)}', space=vmem, size = 0x200, scoped, tag = 'scoped memory for tpu_custom_call.1']
  %s0 = inlined_call_operand.vmem [shape: s32[2,16,1], index: 0, kind: input, shape index: {}]
  %s1 = inlined_call_operand.vmem [shape: f32[128,32], index: 1, kind: input, shape index: {}]
  %s2 = inlined_call_operand.vmem [shape: f32[3,32,32], index: 2, kind: input, shape index: {}]
  %s3 = inlined_call_operand.vmem [shape: f32[1,32], index: 3, kind: input, shape index: {}]
  %s4 = inlined_call_operand.vmem [shape: f32[1,32], index: 4, kind: input, shape index: {}]
  %s5 = inlined_call_operand.<no memory space> [shape: f32[1,1], index: 5, kind: input, shape index: {}]
  %s6 = inlined_call_operand.vmem [shape: f32[2,1,1], index: 6, kind: output, shape index: {}]
  %s7 = sld [smem:[#allocation0]]
  $region57: #{tpu_custom_call.1} parent=0
    _
  %s9 = ssub.s32 1, %s7
  %s10 = scalar_select 0, %s9, %s7
  %v11 = vstv %s5
  %12 = vst [vmem:[#allocation2] sm:$0x1] %v11
  loop: start=0, step=1, limit=4
  $region2: #{tpu_custom_call.1} parent=0 // loop_pre_header
    _
  $region3: #{tpu_custom_call.1} parent=0 // loop_header
    %s14 = sphi 0, %s18
    %p15 = scmp.ge.s32.totalorder %s14, 4
    %s24 = sphi 0, %s26
    %s27 = sphi 0, %s24
    %s28 = sphi 0, %s27
    %s44 = sphi 0, %s28
    %s48 = sphi 0, %s48
    %s50 = sphi 0, %s48
    %s51 = sphi 0, %s50
    %s65 = sphi 0, %s51
    %s69 = sphi 0, %s69
    %s71 = sphi 0, %s69
    %s72 = sphi 0, %s71
    %s86 = sphi 0, %s72
    %s90 = sphi 0, %s90
    %s92 = sphi 0, %s90
    %s93 = sphi 0, %s92
    %s107 = sphi 0, %s93
    %s111 = sphi 0, %s111
    %s113 = sphi 0, %s111
    %s114 = sphi 0, %s113
    %s128 = sphi 0, %s114
    %s132 = sphi 0, %s132
    %s134 = sphi 0, %s132
    %s135 = sphi 0, %s134
    %s149 = sphi 0, %s135
    %s155 = sphi 0, %s157
    %s158 = sphi 0, %s155
    %s159 = sphi 0, %s158
    %s175 = sphi 0, %s159
  $region4: #{tpu_custom_call.1} parent=0 // loop_header_branch
    %17 = sbr.rel (%p15) target = $region8
  $region5: #{tpu_custom_call.1} parent=0 // loop_body
    %s19 = ssub.s32 %s14, 1
    %s20 = ssub.s32 %s14, 2
    %s21 = sadd.s32 %s14, 1
    %s22 = ssub.s32 %s14, %s21
    %p23 = scmp.eq.s32.totalorder %s22, 0
    %s25 = sadd.s32 %s24, 1
    %s26 = scalar_select %p23, %s24, %s25
    %p29 = pneg %p23
    %p30 = scmp.eq.s32.totalorder %s14, 1
    %p31 = por %p29, %p30
    %p32 = scmp.ne.s32.totalorder %s24, %s27
    %p33 = scmp.eq.s32.totalorder %s14, 0
    %p34 = por %p32, %p33
    %p35 = scmp.ne.s32.totalorder %s24, %s27
    %p36 = scmp.eq.s32.totalorder %s19, 1
    %p37 = por %p35, %p36
    %p38 = scmp.ne.s32.totalorder %s27, %s28
    %p39 = scmp.eq.s32.totalorder %s19, 0
    %p40 = por %p38, %p39
    %p41 = scmp.ne.s32.totalorder %s27, %s28
    %p42 = scmp.eq.s32.totalorder %s20, 1
    %p43 = por %p41, %p42
    %p45 = scmp.ne.s32.totalorder %s28, %s44
    %p46 = scmp.eq.s32.totalorder %s20, 0
    %p47 = por %p45, %p46
    %s49 = sadd.s32 %s48, 1
    %p52 = scmp.eq.s32.totalorder %s14, 1
    %p53 = scmp.ne.s32.totalorder %s48, %s50
    %p54 = scmp.eq.s32.totalorder %s14, 0
    %p55 = por %p53, %p54
    %p56 = scmp.ne.s32.totalorder %s48, %s50
    %p57 = scmp.eq.s32.totalorder %s19, 1
    %p58 = por %p56, %p57
    %p59 = scmp.ne.s32.totalorder %s50, %s51
    %p60 = scmp.eq.s32.totalorder %s19, 0
    %p61 = por %p59, %p60
    %p62 = scmp.ne.s32.totalorder %s50, %s51
    %p63 = scmp.eq.s32.totalorder %s20, 1
    %p64 = por %p62, %p63
    %p66 = scmp.ne.s32.totalorder %s51, %s65
    %p67 = scmp.eq.s32.totalorder %s20, 0
    %p68 = por %p66, %p67
    %s70 = sadd.s32 %s69, 1
    %p73 = scmp.eq.s32.totalorder %s14, 1
    %p74 = scmp.ne.s32.totalorder %s69, %s71
    %p75 = scmp.eq.s32.totalorder %s14, 0
    %p76 = por %p74, %p75
    %p77 = scmp.ne.s32.totalorder %s69, %s71
    %p78 = scmp.eq.s32.totalorder %s19, 1
    %p79 = por %p77, %p78
    %p80 = scmp.ne.s32.totalorder %s71, %s72
    %p81 = scmp.eq.s32.totalorder %s19, 0
    %p82 = por %p80, %p81
    %p83 = scmp.ne.s32.totalorder %s71, %s72
    %p84 = scmp.eq.s32.totalorder %s20, 1
    %p85 = por %p83, %p84
    %p87 = scmp.ne.s32.totalorder %s72, %s86
    %p88 = scmp.eq.s32.totalorder %s20, 0
    %p89 = por %p87, %p88
    %s91 = sadd.s32 %s90, 1
    %p94 = scmp.eq.s32.totalorder %s14, 1
    %p95 = scmp.ne.s32.totalorder %s90, %s92
    %p96 = scmp.eq.s32.totalorder %s14, 0
    %p97 = por %p95, %p96
    %p98 = scmp.ne.s32.totalorder %s90, %s92
    %p99 = scmp.eq.s32.totalorder %s19, 1
    %p100 = por %p98, %p99
    %p101 = scmp.ne.s32.totalorder %s92, %s93
    %p102 = scmp.eq.s32.totalorder %s19, 0
    %p103 = por %p101, %p102
    %p104 = scmp.ne.s32.totalorder %s92, %s93
    %p105 = scmp.eq.s32.totalorder %s20, 1
    %p106 = por %p104, %p105
    %p108 = scmp.ne.s32.totalorder %s93, %s107
    %p109 = scmp.eq.s32.totalorder %s20, 0
    %p110 = por %p108, %p109
    %s112 = sadd.s32 %s111, 1
    %p115 = scmp.eq.s32.totalorder %s14, 1
    %p116 = scmp.ne.s32.totalorder %s111, %s113
    %p117 = scmp.eq.s32.totalorder %s14, 0
    %p118 = por %p116, %p117
    %p119 = scmp.ne.s32.totalorder %s111, %s113
    %p120 = scmp.eq.s32.totalorder %s19, 1
    %p121 = por %p119, %p120
    %p122 = scmp.ne.s32.totalorder %s113, %s114
    %p123 = scmp.eq.s32.totalorder %s19, 0
    %p124 = por %p122, %p123
    %p125 = scmp.ne.s32.totalorder %s113, %s114
    %p126 = scmp.eq.s32.totalorder %s20, 1
    %p127 = por %p125, %p126
    %p129 = scmp.ne.s32.totalorder %s114, %s128
    %p130 = scmp.eq.s32.totalorder %s20, 0
    %p131 = por %p129, %p130
    %s133 = sadd.s32 %s132, 1
    %p136 = scmp.eq.s32.totalorder %s14, 1
    %p137 = scmp.ne.s32.totalorder %s132, %s134
    %p138 = scmp.eq.s32.totalorder %s14, 0
    %p139 = por %p137, %p138
    %p140 = scmp.ne.s32.totalorder %s132, %s134
    %p141 = scmp.eq.s32.totalorder %s19, 1
    %p142 = por %p140, %p141
    %p143 = scmp.ne.s32.totalorder %s134, %s135
    %p144 = scmp.eq.s32.totalorder %s19, 0
    %p145 = por %p143, %p144
    %p146 = scmp.ne.s32.totalorder %s134, %s135
    %p147 = scmp.eq.s32.totalorder %s20, 1
    %p148 = por %p146, %p147
    %p150 = scmp.ne.s32.totalorder %s135, %s149
    %p151 = scmp.eq.s32.totalorder %s20, 0
    %p152 = por %p150, %p151
    %s153 = ssub.s32 %s14, %s21
    %p154 = scmp.eq.s32.totalorder %s153, 0
    %s156 = sadd.s32 %s155, 1
    %s157 = scalar_select %p154, %s155, %s156
    %p160 = pneg %p154
    %p161 = scmp.eq.s32.totalorder %s14, 1
    %p162 = por %p160, %p161
    %p163 = scmp.ne.s32.totalorder %s155, %s158
    %p164 = scmp.eq.s32.totalorder %s14, 0
    %p165 = por %p163, %p164
    %p166 = scmp.ne.s32.totalorder %s155, %s158
    %p167 = scmp.eq.s32.totalorder %s19, 1
    %p168 = por %p166, %p167
    %p169 = scmp.ne.s32.totalorder %s158, %s159
    %p170 = scmp.eq.s32.totalorder %s19, 0
    %p171 = por %p169, %p170
    %p172 = scmp.ne.s32.totalorder %s158, %s159
    %p173 = scmp.eq.s32.totalorder %s20, 1
    %p174 = por %p172, %p173
    %p176 = scmp.ne.s32.totalorder %s159, %s175
    %p177 = scmp.eq.s32.totalorder %s20, 0
    %p178 = por %p176, %p177
    %p179 = scmp.le.s32.totalorder 1, %s14
    %p180 = scmp.lt.s32.totalorder %s14, 3
    %p181 = pnand %p179, %p180
    %p182 = pneg %p181
    // Predicated region
    $region9: #{tpu_custom_call.1} parent=5 // pred_check
      _
    $region10: #{tpu_custom_call.1} parent=5 // pred_check_branch
      %184 = sbr.rel (%p181) target = $region12
    $region11: #{tpu_custom_call.1} parent=5 // pred_region
      %s185 = ssub.s32 %s14, 1
      // Predicated region
      $region13: #{tpu_custom_call.1} parent=11 // pred_check
        %p186 = pneg %p61
      $region14: #{tpu_custom_call.1} parent=11 // pred_check_branch
        %188 = sbr.rel (%p186) target = $region16
      $region15: #{tpu_custom_call.1} parent=11 // pred_region
        _
      $region16: #{tpu_custom_call.1} parent=11 // pred_fallthru
        _
      // Predicated region
      $region17: #{tpu_custom_call.1} parent=11 // pred_check
        %p189 = pneg %p82
      $region18: #{tpu_custom_call.1} parent=11 // pred_check_branch
        %191 = sbr.rel (%p189) target = $region20
      $region19: #{tpu_custom_call.1} parent=11 // pred_region
        _
      $region20: #{tpu_custom_call.1} parent=11 // pred_fallthru
        _
      // Predicated region
      $region21: #{tpu_custom_call.1} parent=11 // pred_check
        %p192 = pneg %p103
      $region22: #{tpu_custom_call.1} parent=11 // pred_check_branch
        %194 = sbr.rel (%p192) target = $region24
      $region23: #{tpu_custom_call.1} parent=11 // pred_region
        _
      $region24: #{tpu_custom_call.1} parent=11 // pred_fallthru
        _
      // Predicated region
      $region25: #{tpu_custom_call.1} parent=11 // pred_check
        %p195 = pneg %p124
      $region26: #{tpu_custom_call.1} parent=11 // pred_check_branch
        %197 = sbr.rel (%p195) target = $region28
      $region27: #{tpu_custom_call.1} parent=11 // pred_region
        _
      $region28: #{tpu_custom_call.1} parent=11 // pred_fallthru
        _
      // Predicated region
      $region29: #{tpu_custom_call.1} parent=11 // pred_check
        %p198 = pneg %p145
      $region30: #{tpu_custom_call.1} parent=11 // pred_check_branch
        %200 = sbr.rel (%p198) target = $region32
      $region31: #{tpu_custom_call.1} parent=11 // pred_region
        _
      $region32: #{tpu_custom_call.1} parent=11 // pred_fallthru
        _
    $region12: #{tpu_custom_call.1} parent=5 // pred_fallthru
      _
    %p201 = scmp.lt.s32.totalorder %s14, 2
    // Predicated region
    $region33: #{tpu_custom_call.1} parent=5 // pred_check
      %p202 = pneg %p201
    $region34: #{tpu_custom_call.1} parent=5 // pred_check_branch
      %204 = sbr.rel (%p202) target = $region36
    $region35: #{tpu_custom_call.1} parent=5 // pred_region
      // Predicated region
      $region37: #{tpu_custom_call.1} parent=35 // pred_check
        %p205 = pneg %p34
      $region38: #{tpu_custom_call.1} parent=35 // pred_check_branch
        %207 = sbr.rel (%p205) target = $region40
      $region39: #{tpu_custom_call.1} parent=35 // pred_region
        %p208 = scmp.lt.s32.totalorder %s14, 1
        %s209 = scalar_select %p208, %s14, 1
        %s210 = smul.addr %s209, 2
        %s211 = smul.addr %s210, 8
        %s212 = scalar_lea.vmem %s0, %s211
      $region40: #{tpu_custom_call.1} parent=35 // pred_fallthru
        _
    $region36: #{tpu_custom_call.1} parent=5 // pred_fallthru
      _
    %p213 = scmp.le.s32.totalorder 1, %s14
    %p214 = scmp.lt.s32.totalorder %s14, 3
    %p215 = pnand %p213, %p214
    %p216 = pneg %p215
    // Predicated region
    $region41: #{tpu_custom_call.1} parent=5 // pred_check
      _
    $region42: #{tpu_custom_call.1} parent=5 // pred_check_branch
      %218 = sbr.rel (%p215) target = $region44
    $region43: #{tpu_custom_call.1} parent=5 // pred_region
      %s219 = ssub.s32 %s14, 1
      %p220 = scmp.lt.s32.totalorder %s19, 1
      %s221 = scalar_select %p220, %s19, 1
      %s222 = smul.addr %s221, 2
      %s223 = smul.addr %s222, 8
      %s224 = scalar_lea.vmem %s0, %s223
      %p225 = pneg %p40
      %p226 = pneg %p37
      %p227 = pneg %p61
      %p228 = pneg %p58
      %p229 = pneg %p82
      %p230 = pneg %p79
      %p231 = pneg %p103
      %p232 = pneg %p100
      %p233 = pneg %p124
      %p234 = pneg %p121
      %p235 = pneg %p145
      %p236 = pneg %p142
      %p237 = pneg %p171
      %p238 = pneg %p168
      %p239 = scmp.lt.s32.totalorder %s19, 1
      %s240 = scalar_select %p239, %s19, 1
      %s241 = scalar_lea.vmem %s6, %s240
      %p242 = scmp.lt.s32.totalorder %s19, 1
      %s243 = scalar_select %p242, %s19, 1
      %s244 = smul.addr %s243, 2
      %s245 = smul.addr %s244, 8
      %s246 = scalar_lea.vmem %s0, %s245
      %p247 = scmp.lt.s32.totalorder %s19, 1
      %s248 = scalar_select %p247, %s19, 1
      %s249 = scalar_lea.vmem %s6, %s248
      %v250 = vld [vmem:[%s246] sm:$0xff]
      %v251 = vld [vmem:[%s246 + $0x8] sm:$0xff]
      %v252 = vlaneseq
      %v253 = vand.u32 %v252, 127
      %254 = vset.pattern.permute.xlu0 0
      %255 = vperm.xlu0 %254, %v250
      %v256 = vpop.permute.xlu0 %255
      %257 = vset.pattern.permute.xlu0 0
      %258 = vperm.xlu0 %257, %v251
      %v259 = vpop.permute.xlu0 %258
      %vm260 = vcmp.eq.s32.totalorder %v253, %v256
      %vm261 = vcmp.eq.s32.totalorder %v253, %v259
      %v262 = vsel %vm260, 1, 0
      %v263 = vsel %vm261, 1, 0
      %v264 = vcvt.s32.f32 %v262
      %v265 = vcvt.s32.f32 %v263
      %v266 = vld [vmem:[%s1] sm:$0xff]
      %v267 = vld [vmem:[%s1 + $0x8] sm:$0xff]
      %v268 = vld [vmem:[%s1 + $0x10] sm:$0xff]
      %v269 = vld [vmem:[%s1 + $0x18] sm:$0xff]
      %v270 = vld [vmem:[%s1 + $0x20] sm:$0xff]
      %v271 = vld [vmem:[%s1 + $0x28] sm:$0xff]
      %v272 = vld [vmem:[%s1 + $0x30] sm:$0xff]
      %v273 = vld [vmem:[%s1 + $0x38] sm:$0xff]
      %v274 = vld [vmem:[%s1 + $0x40] sm:$0xff]
      %v275 = vld [vmem:[%s1 + $0x48] sm:$0xff]
      %v276 = vld [vmem:[%s1 + $0x50] sm:$0xff]
      %v277 = vld [vmem:[%s1 + $0x58] sm:$0xff]
      %v278 = vld [vmem:[%s1 + $0x60] sm:$0xff]
      %v279 = vld [vmem:[%s1 + $0x68] sm:$0xff]
      %v280 = vld [vmem:[%s1 + $0x70] sm:$0xff]
      %v281 = vld [vmem:[%s1 + $0x78] sm:$0xff]
      %282 = vmatprep.subr.mxu0 0.0
      %283 = vmatpush1.msra.mxu0 %v266
      %284 = vmatprep.subr.mxu0 0.0
      %285 = vmatpush1.msra.mxu0 %v267
      %286 = vmatprep.subr.mxu0 0.0
      %287 = vmatpush1.msra.mxu0 %v268
      %288 = vmatprep.subr.mxu0 0.0
      %289 = vmatpush1.msra.mxu0 %v269
      %290 = vmatprep.subr.mxu0 0.0
      %291 = vmatpush1.msra.mxu0 %v270
      %292 = vmatprep.subr.mxu0 0.0
      %293 = vmatpush1.msra.mxu0 %v271
      %294 = vmatprep.subr.mxu0 0.0
      %295 = vmatpush1.msra.mxu0 %v272
      %296 = vmatprep.subr.mxu0 0.0
      %297 = vmatpush1.msra.mxu0 %v273
      %298 = vmatprep.subr.mxu0 0.0
      %299 = vmatpush1.msra.mxu0 %v274
      %300 = vmatprep.subr.mxu0 0.0
      %301 = vmatpush1.msra.mxu0 %v275
      %302 = vmatprep.subr.mxu0 0.0
      %303 = vmatpush1.msra.mxu0 %v276
      %304 = vmatprep.subr.mxu0 0.0
      %305 = vmatpush1.msra.mxu0 %v277
      %306 = vmatprep.subr.mxu0 0.0
      %307 = vmatpush1.msra.mxu0 %v278
      %308 = vmatprep.subr.mxu0 0.0
      %309 = vmatpush1.msra.mxu0 %v279
      %310 = vmatprep.subr.mxu0 0.0
      %311 = vmatpush1.msra.mxu0 %v280
      %312 = vmatprep.subr.mxu0 0.0
      %313 = vmatpush1.msra.mxu0 %v281
      %314 = vmatprep.subr.mxu0 0.0
      %315 = vmatpush1.msra.mxu0 0.0
      %316 = vmatprep.subr.mxu0 0.0
      %317 = vmatpush1.msra.mxu0 0.0
      %318 = vmatprep.subr.mxu0 0.0
      %319 = vmatpush1.msra.mxu0 0.0
      %320 = vmatprep.subr.mxu0 0.0
      %321 = vmatpush1.msra.mxu0 0.0
      %322 = vmatprep.subr.mxu0 0.0
      %323 = vmatpush1.msra.mxu0 0.0
      %324 = vmatprep.subr.mxu0 0.0
      %325 = vmatpush1.msra.mxu0 0.0
      %326 = vmatprep.subr.mxu0 0.0
      %327 = vmatpush1.msra.mxu0 0.0
      %328 = vmatprep.subr.mxu0 0.0
      %329 = vmatpush1.msra.mxu0 0.0
      %330 = vmatprep.subr.mxu0 0.0
      %331 = vmatpush1.msra.mxu0 0.0
      %332 = vmatprep.subr.mxu0 0.0
      %333 = vmatpush1.msra.mxu0 0.0
      %334 = vmatprep.subr.mxu0 0.0
      %335 = vmatpush1.msra.mxu0 0.0
      %336 = vmatprep.subr.mxu0 0.0
      %337 = vmatpush1.msra.mxu0 0.0
      %338 = vmatprep.subr.mxu0 0.0
      %339 = vmatpush1.msra.mxu0 0.0
      %340 = vmatprep.subr.mxu0 0.0
      %341 = vmatpush1.msra.mxu0 0.0
      %342 = vmatprep.subr.mxu0 0.0
      %343 = vmatpush1.msra.mxu0 0.0
      %344 = vmatprep.subr.mxu0 0.0
      %345 = vmatpush1.msra.mxu0 0.0
      %346 = vmatprep.mubr.f32.mxu0 0.0
      %347 = vmatmul.mubr.f32.gmra.mrb[0].mxu0 %v264
      %v348 = vpop.f32.mrb[0].mxu0
      %v349 = vadd.f32 0.0, %v348
      %v350 = vpop.f32.mrb[0].mxu0
      %351 = vmatprep.mubr.f32.mxu0 0.0
      %352 = vmatmul.mubr.f32.gmra.mrb[0].mxu0 %v265
      %v353 = vpop.f32.mrb[0].mxu0
      %v354 = vadd.f32 0.0, %v353
      %v355 = vpop.f32.mrb[0].mxu0
      %356 = vdwg.mxu0
      %v357 = vld [vmem:[%s2] sm:$0xff]
      %v358 = vld [vmem:[%s2 + $0x8] sm:$0xff]
      %v359 = vld [vmem:[%s2 + $0x10] sm:$0xff]
      %v360 = vld [vmem:[%s2 + $0x18] sm:$0xff]
      %s361 = scalar_lea.vmem %s2, 32
      %v362 = vld [vmem:[%s361] sm:$0xff]
      %v363 = vld [vmem:[%s361 + $0x8] sm:$0xff]
      %v364 = vld [vmem:[%s361 + $0x10] sm:$0xff]
      %v365 = vld [vmem:[%s361 + $0x18] sm:$0xff]
      %vm368 = vcmask 1046528
      %v369 = vrot.slane %v349, 1
      %v370 = vrot.slane %v354, 1
      %v371 = vsel %vm368, %v369, %v370
      %vm372 = vcmask 261120
      %v373 = vsel %vm372, %v371, 0
      %v375 = vsel %vm372, %v370, 0
      %377 = vmatprep.subr.mxu0 0.0
      %378 = vmatpush1.msra.mxu0 %v362
      %379 = vmatprep.subr.mxu0 0.0
      %380 = vmatpush1.msra.mxu0 %v363
      %381 = vmatprep.subr.mxu0 0.0
      %382 = vmatpush1.msra.mxu0 %v364
      %383 = vmatprep.subr.mxu0 0.0
      %384 = vmatpush1.msra.mxu0 %v365
      %385 = vmatprep.subr.mxu0 0.0
      %386 = vmatpush1.msra.mxu0 0.0
      %387 = vmatprep.subr.mxu0 0.0
      %388 = vmatpush1.msra.mxu0 0.0
      %389 = vmatprep.subr.mxu0 0.0
      %390 = vmatpush1.msra.mxu0 0.0
      %391 = vmatprep.subr.mxu0 0.0
      %392 = vmatpush1.msra.mxu0 0.0
      %393 = vmatprep.subr.mxu0 0.0
      %394 = vmatpush1.msra.mxu0 0.0
      %395 = vmatprep.subr.mxu0 0.0
      %396 = vmatpush1.msra.mxu0 0.0
      %397 = vmatprep.subr.mxu0 0.0
      %398 = vmatpush1.msra.mxu0 0.0
      %399 = vmatprep.subr.mxu0 0.0
      %400 = vmatpush1.msra.mxu0 0.0
      %401 = vmatprep.subr.mxu0 0.0
      %402 = vmatpush1.msra.mxu0 0.0
      %403 = vmatprep.subr.mxu0 0.0
      %404 = vmatpush1.msra.mxu0 0.0
      %405 = vmatprep.subr.mxu0 0.0
      %406 = vmatpush1.msra.mxu0 0.0
      %407 = vmatprep.subr.mxu0 0.0
      %408 = vmatpush1.msra.mxu0 0.0
      %409 = vmatprep.subr.mxu0 0.0
      %410 = vmatpush1.msra.mxu0 0.0
      %411 = vmatprep.subr.mxu0 0.0
      %412 = vmatpush1.msra.mxu0 0.0
      %413 = vmatprep.subr.mxu0 0.0
      %414 = vmatpush1.msra.mxu0 0.0
      %415 = vmatprep.subr.mxu0 0.0
      %416 = vmatpush1.msra.mxu0 0.0
      %417 = vmatprep.subr.mxu0 0.0
      %418 = vmatpush1.msra.mxu0 0.0
      %419 = vmatprep.subr.mxu0 0.0
      %420 = vmatpush1.msra.mxu0 0.0
      %421 = vmatprep.subr.mxu0 0.0
      %422 = vmatpush1.msra.mxu0 0.0
      %423 = vmatprep.subr.mxu0 0.0
      %424 = vmatpush1.msra.mxu0 0.0
      %425 = vmatprep.subr.mxu0 0.0
      %426 = vmatpush1.msra.mxu0 0.0
      %427 = vmatprep.subr.mxu0 0.0
      %428 = vmatpush1.msra.mxu0 0.0
      %429 = vmatprep.subr.mxu0 0.0
      %430 = vmatpush1.msra.mxu0 0.0
      %431 = vmatprep.subr.mxu0 0.0
      %432 = vmatpush1.msra.mxu0 0.0
      %433 = vmatprep.subr.mxu0 0.0
      %434 = vmatpush1.msra.mxu0 0.0
      %435 = vmatprep.subr.mxu0 0.0
      %436 = vmatpush1.msra.mxu0 0.0
      %437 = vmatprep.subr.mxu0 0.0
      %438 = vmatpush1.msra.mxu0 0.0
      %439 = vmatprep.subr.mxu0 0.0
      %440 = vmatpush1.msra.mxu0 0.0
      %441 = vmatprep.mubr.f32.mxu0 0.0
      %442 = vmatmul.mubr.f32.gmra.mrb[0].mxu0 %v373
      %v443 = vpop.f32.mrb[0].mxu0
      %v444 = vadd.f32 0.0, %v443
      %v445 = vpop.f32.mrb[0].mxu0
      %446 = vmatprep.mubr.f32.mxu0 0.0
      %447 = vmatmul.mubr.f32.gmra.mrb[0].mxu0 %v375
      %v448 = vpop.f32.mrb[0].mxu0
      %v449 = vadd.f32 0.0, %v448
      %v450 = vpop.f32.mrb[0].mxu0
      %451 = vdwg.mxu0
      %v452 = vsel %vm372, %v349, 0
      %v454 = vsel %vm372, %v354, 0
      %456 = vmatprep.subr.mxu0 0.0
      %457 = vmatpush1.msra.mxu0 %v357
      %458 = vmatprep.subr.mxu0 0.0
      %459 = vmatpush1.msra.mxu0 %v358
      %460 = vmatprep.subr.mxu0 0.0
      %461 = vmatpush1.msra.mxu0 %v359
      %462 = vmatprep.subr.mxu0 0.0
      %463 = vmatpush1.msra.mxu0 %v360
      %464 = vmatprep.subr.mxu0 0.0
      %465 = vmatpush1.msra.mxu0 0.0
      %466 = vmatprep.subr.mxu0 0.0
      %467 = vmatpush1.msra.mxu0 0.0
      %468 = vmatprep.subr.mxu0 0.0
      %469 = vmatpush1.msra.mxu0 0.0
      %470 = vmatprep.subr.mxu0 0.0
      %471 = vmatpush1.msra.mxu0 0.0
      %472 = vmatprep.subr.mxu0 0.0
      %473 = vmatpush1.msra.mxu0 0.0
      %474 = vmatprep.subr.mxu0 0.0
      %475 = vmatpush1.msra.mxu0 0.0
      %476 = vmatprep.subr.mxu0 0.0
      %477 = vmatpush1.msra.mxu0 0.0
      %478 = vmatprep.subr.mxu0 0.0
      %479 = vmatpush1.msra.mxu0 0.0
      %480 = vmatprep.subr.mxu0 0.0
      %481 = vmatpush1.msra.mxu0 0.0
      %482 = vmatprep.subr.mxu0 0.0
      %483 = vmatpush1.msra.mxu0 0.0
      %484 = vmatprep.subr.mxu0 0.0
      %485 = vmatpush1.msra.mxu0 0.0
      %486 = vmatprep.subr.mxu0 0.0
      %487 = vmatpush1.msra.mxu0 0.0
      %488 = vmatprep.subr.mxu0 0.0
      %489 = vmatpush1.msra.mxu0 0.0
      %490 = vmatprep.subr.mxu0 0.0
      %491 = vmatpush1.msra.mxu0 0.0
      %492 = vmatprep.subr.mxu0 0.0
      %493 = vmatpush1.msra.mxu0 0.0
      %494 = vmatprep.subr.mxu0 0.0
      %495 = vmatpush1.msra.mxu0 0.0
      %496 = vmatprep.subr.mxu0 0.0
      %497 = vmatpush1.msra.mxu0 0.0
      %498 = vmatprep.subr.mxu0 0.0
      %499 = vmatpush1.msra.mxu0 0.0
      %500 = vmatprep.subr.mxu0 0.0
      %501 = vmatpush1.msra.mxu0 0.0
      %502 = vmatprep.subr.mxu0 0.0
      %503 = vmatpush1.msra.mxu0 0.0
      %504 = vmatprep.subr.mxu0 0.0
      %505 = vmatpush1.msra.mxu0 0.0
      %506 = vmatprep.subr.mxu0 0.0
      %507 = vmatpush1.msra.mxu0 0.0
      %508 = vmatprep.subr.mxu0 0.0
      %509 = vmatpush1.msra.mxu0 0.0
      %510 = vmatprep.subr.mxu0 0.0
      %511 = vmatpush1.msra.mxu0 0.0
      %512 = vmatprep.subr.mxu0 0.0
      %513 = vmatpush1.msra.mxu0 0.0
      %514 = vmatprep.subr.mxu0 0.0
      %515 = vmatpush1.msra.mxu0 0.0
      %516 = vmatprep.subr.mxu0 0.0
      %517 = vmatpush1.msra.mxu0 0.0
      %518 = vmatprep.subr.mxu0 0.0
      %519 = vmatpush1.msra.mxu0 0.0
      %520 = vmatprep.mubr.f32.mxu0 0.0
      %521 = vmatmul.mubr.f32.gmra.mrb[0].mxu0 %v452
      %v522 = vpop.f32.mrb[0].mxu0
      %v523 = vadd.f32 %v444, %v522
      %v524 = vpop.f32.mrb[0].mxu0
      %525 = vmatprep.mubr.f32.mxu0 0.0
      %526 = vmatmul.mubr.f32.gmra.mrb[0].mxu0 %v454
      %v527 = vpop.f32.mrb[0].mxu0
      %v528 = vadd.f32 %v449, %v527
      %v529 = vpop.f32.mrb[0].mxu0
      %530 = vdwg.mxu0
      %s531 = scalar_lea.vmem %s2, 64
      %v532 = vld [vmem:[%s531] sm:$0xff]
      %v533 = vld [vmem:[%s531 + $0x8] sm:$0xff]
      %v534 = vld [vmem:[%s531 + $0x10] sm:$0xff]
      %v535 = vld [vmem:[%s531 + $0x18] sm:$0xff]
      %vm536 = vcmask 1045504
      %v537 = vrot.slane %v349, 2
      %v538 = vrot.slane %v354, 2
      %v539 = vsel %vm536, %v537, %v538
      %v540 = vsel %vm372, %v539, 0
      %v542 = vsel %vm372, %v538, 0
      %544 = vmatprep.subr.mxu0 0.0
      %545 = vmatpush1.msra.mxu0 %v532
      %546 = vmatprep.subr.mxu0 0.0
      %547 = vmatpush1.msra.mxu0 %v533
      %548 = vmatprep.subr.mxu0 0.0
      %549 = vmatpush1.msra.mxu0 %v534
      %550 = vmatprep.subr.mxu0 0.0
      %551 = vmatpush1.msra.mxu0 %v535
      %552 = vmatprep.subr.mxu0 0.0
      %553 = vmatpush1.msra.mxu0 0.0
      %554 = vmatprep.subr.mxu0 0.0
      %555 = vmatpush1.msra.mxu0 0.0
      %556 = vmatprep.subr.mxu0 0.0
      %557 = vmatpush1.msra.mxu0 0.0
      %558 = vmatprep.subr.mxu0 0.0
      %559 = vmatpush1.msra.mxu0 0.0
      %560 = vmatprep.subr.mxu0 0.0
      %561 = vmatpush1.msra.mxu0 0.0
      %562 = vmatprep.subr.mxu0 0.0
      %563 = vmatpush1.msra.mxu0 0.0
      %564 = vmatprep.subr.mxu0 0.0
      %565 = vmatpush1.msra.mxu0 0.0
      %566 = vmatprep.subr.mxu0 0.0
      %567 = vmatpush1.msra.mxu0 0.0
      %568 = vmatprep.subr.mxu0 0.0
      %569 = vmatpush1.msra.mxu0 0.0
      %570 = vmatprep.subr.mxu0 0.0
      %571 = vmatpush1.msra.mxu0 0.0
      %572 = vmatprep.subr.mxu0 0.0
      %573 = vmatpush1.msra.mxu0 0.0
      %574 = vmatprep.subr.mxu0 0.0
      %575 = vmatpush1.msra.mxu0 0.0
      %576 = vmatprep.subr.mxu0 0.0
      %577 = vmatpush1.msra.mxu0 0.0
      %578 = vmatprep.subr.mxu0 0.0
      %579 = vmatpush1.msra.mxu0 0.0
      %580 = vmatprep.subr.mxu0 0.0
      %581 = vmatpush1.msra.mxu0 0.0
      %582 = vmatprep.subr.mxu0 0.0
      %583 = vmatpush1.msra.mxu0 0.0
      %584 = vmatprep.subr.mxu0 0.0
      %585 = vmatpush1.msra.mxu0 0.0
      %586 = vmatprep.subr.mxu0 0.0
      %587 = vmatpush1.msra.mxu0 0.0
      %588 = vmatprep.subr.mxu0 0.0
      %589 = vmatpush1.msra.mxu0 0.0
      %590 = vmatprep.subr.mxu0 0.0
      %591 = vmatpush1.msra.mxu0 0.0
      %592 = vmatprep.subr.mxu0 0.0
      %593 = vmatpush1.msra.mxu0 0.0
      %594 = vmatprep.subr.mxu0 0.0
      %595 = vmatpush1.msra.mxu0 0.0
      %596 = vmatprep.subr.mxu0 0.0
      %597 = vmatpush1.msra.mxu0 0.0
      %598 = vmatprep.subr.mxu0 0.0
      %599 = vmatpush1.msra.mxu0 0.0
      %600 = vmatprep.subr.mxu0 0.0
      %601 = vmatpush1.msra.mxu0 0.0
      %602 = vmatprep.subr.mxu0 0.0
      %603 = vmatpush1.msra.mxu0 0.0
      %604 = vmatprep.subr.mxu0 0.0
      %605 = vmatpush1.msra.mxu0 0.0
      %606 = vmatprep.subr.mxu0 0.0
      %607 = vmatpush1.msra.mxu0 0.0
      %608 = vmatprep.mubr.f32.mxu0 0.0
      %609 = vmatmul.mubr.f32.gmra.mrb[0].mxu0 %v540
      %v610 = vpop.f32.mrb[0].mxu0
      %v611 = vadd.f32 0.0, %v610
      %v612 = vpop.f32.mrb[0].mxu0
      %613 = vmatprep.mubr.f32.mxu0 0.0
      %614 = vmatmul.mubr.f32.gmra.mrb[0].mxu0 %v542
      %v615 = vpop.f32.mrb[0].mxu0
      %v616 = vadd.f32 0.0, %v615
      %v617 = vpop.f32.mrb[0].mxu0
      %618 = vdwg.mxu0
      %v619 = vadd.f32 %v523, %v611
      %v620 = vadd.f32 %v528, %v616
      %v621 = vld [vmem:[%s3] sm:$0x1]
      %v623 = vlaneseq
      %v624 = vshrl.u32 %v623, 7
      %v625 = vsub.s32 0, %v624
      %v626 = vrot.slane %v621, %v625
      %v628 = vadd.f32 %v619, %v626
      %v629 = vadd.f32 %v620, %v626
      %v630 = vmax.f32 %v628, 0.0
      %v631 = vmax.f32 %v629, 0.0
      %v632 = vsel %vm372, %v630, -inf
      %vm633 = vcmask 259072
      %v634 = vsel %vm633, %v631, -inf
      %v635 = vmax.f32 %v632, %v634
      %v636 = vrot.slane %v635, 4
      %v637 = vmax.f32 %v635, %v636
      %v638 = vrot.slane %v637, 2
      %v639 = vmax.f32 %v637, %v638
      %v640 = vrot.slane %v639, 1
      %v641 = vmax.f32 %v639, %v640
      %v642 = vld [vmem:[%s4] sm:$0x1]
      %v643 = vmul.f32 %v641, %v642
      %vm644 = vcmask 253952
      %v645 = vsel %vm644, %v643, 0.0
      %646 = vadd.xlane.f32.xlu0 %v645
      %v647 = vpop.xlane.xlu0 %646
      %v648 = vld [vmem:[#allocation2] sm:$0x1]
      %v649 = vadd.f32 %v647, %v648
      %vm650 = vcmask 0
      %651 = vst.msk [vmem:[%s249] sm:$0x1] %vm650, %v649
      %p652 = scmp.lt.s32.totalorder %s19, 1
      %s653 = scalar_select %p652, %s19, 1
      %s654 = scalar_lea.vmem %s6, %s653
      // Predicated region
      $region45: #{tpu_custom_call.1} parent=43 // pred_check
        %p655 = pneg %p168
      $region46: #{tpu_custom_call.1} parent=43 // pred_check_branch
        %657 = sbr.rel (%p655) target = $region48
      $region47: #{tpu_custom_call.1} parent=43 // pred_region
        _
      $region48: #{tpu_custom_call.1} parent=43 // pred_fallthru
        _
    $region44: #{tpu_custom_call.1} parent=5 // pred_fallthru
      _
    %p658 = scmp.le.s32.totalorder 2, %s14
    // Predicated region
    $region49: #{tpu_custom_call.1} parent=5 // pred_check
      %p659 = pneg %p658
    $region50: #{tpu_custom_call.1} parent=5 // pred_check_branch
      %661 = sbr.rel (%p659) target = $region52
    $region51: #{tpu_custom_call.1} parent=5 // pred_region
      %s662 = ssub.s32 %s14, 2
      // Predicated region
      $region53: #{tpu_custom_call.1} parent=51 // pred_check
        %p663 = pneg %p174
      $region54: #{tpu_custom_call.1} parent=51 // pred_check_branch
        %665 = sbr.rel (%p663) target = $region56
      $region55: #{tpu_custom_call.1} parent=51 // pred_region
        %p666 = scmp.lt.s32.totalorder %s20, 1
        %s667 = scalar_select %p666, %s20, 1
        %s668 = scalar_lea.vmem %s6, %s667
      $region56: #{tpu_custom_call.1} parent=51 // pred_fallthru
        _
    $region52: #{tpu_custom_call.1} parent=5 // pred_fallthru
      _
  $region6: #{tpu_custom_call.1} parent=0 // loop_footer
    %s18 = sadd.s32 1, %s14
  $region7: #{tpu_custom_call.1} parent=0 // loop_footer_branch
    %13 = sbr.rel target = $region3
  $region8: #{tpu_custom_call.1} parent=0 // loop_exit
    _

</llo_original>
